<compile_context>
chip_gen: v5e
topology: v5e:2x2
jax: 0.10.0
libtpu: 0.0.40
codegen_flags: <defaults>
</compile_context>

<pallas_src>
import functools

import jax
import jax.numpy as jnp
from jax.experimental import pallas as pl
from jax.experimental.pallas import tpu as pltpu


def _round_up(x: int, m: int) -> int:
    return (x + m - 1) // m * m


def _dequant_kernel(x_ref, o_ref, *, B: int):
    """Bit-plane weighted sum on the VPU.

    x_ref: (B, TM, Cp) bf16 bit-planes, o_ref: (TM, Cp) f32.
    """
    acc = x_ref[0].astype(jnp.float32) * (2.0 ** (B - 1))
    for i in range(1, B):  # B is small & static -> unrolled FMAs
        acc = acc + x_ref[i].astype(jnp.float32) * (2.0 ** (B - 1 - i))
    o_ref[...] = acc


def dequantization_layer(x: jnp.ndarray, B: int) -> jnp.ndarray:
    """JAX/Pallas equivalent of DequantizationLayer(B)(x). x: [N, C*B] -> [N, C] f32."""
    N, CB = x.shape
    assert CB % B == 0, "last dim must be divisible by B"
    C = CB // B

    # Bit-planes: planes[i, n, c] = x[n, c*B + i].  Cast to bf16 (exact for
    # 0/1 bits) so the kernel's HBM read traffic is halved vs f32; the
    # reshape/transpose/cast fuse into one XLA pass.
    planes = jnp.transpose(x.reshape(N, C, B), (2, 0, 1)).astype(jnp.bfloat16)

    # Lane-dense output: pad C up to a multiple of 128.
    Cp = _round_up(max(C, 1), 128)

    # Row tile: as large as a modest VMEM budget allows (double-buffered in +
    # out must stay well under the v7x scoped-VMEM default), multiple of 8.
    bytes_per_row = B * Cp * 2 + Cp * 4          # bf16 input rows + f32 output row
    TM = max(8, min(512, (4 * 1024 * 1024) // max(bytes_per_row, 1)))
    TM = max(8, (TM // 8) * 8)
    TM = min(TM, _round_up(N, 8))
    Np = _round_up(N, TM)

    planes = jnp.pad(planes, ((0, 0), (0, Np - N), (0, Cp - C)))

    grid = (Np // TM,)
    cost = pl.CostEstimate(
        flops=2 * Np * Cp * B,
        transcendentals=0,
        bytes_accessed=Np * B * Cp * 2 + Np * Cp * 4,
    )

    out = pl.pallas_call(
        functools.partial(_dequant_kernel, B=B),
        out_shape=jax.ShapeDtypeStruct((Np, Cp), jnp.float32),
        grid=grid,
        in_specs=[pl.BlockSpec((B, TM, Cp), lambda m: (0, m, 0))],
        out_specs=pl.BlockSpec((TM, Cp), lambda m: (m, 0)),
        compiler_params=pltpu.CompilerParams(
            dimension_semantics=("parallel",),
            vmem_limit_bytes=32 * 1024 * 1024,
        ),
        cost_estimate=cost,
    )(planes)

    return out[:N, :C]


def _reference(x: jnp.ndarray, B: int) -> jnp.ndarray:
    """Pure-JAX reference matching PyTorch Bit2Num exactly."""
    x = x.astype(jnp.float32)
    N, CB = x.shape
    C = CB // B
    xr = x.reshape(N, C, B)
    weights = 2.0 ** (B - 1 - jnp.arange(B)).astype(jnp.float32)
    return jnp.sum(xr * weights[None, None, :], axis=-1)


if __name__ == "__main__":
    key = jax.random.PRNGKey(0)
    B = 4          # bits per quantized value
    N = 8          # batch
    C = 32         # number of dequantized values per row
    # Deterministic synthetic bit input, shape [N, C*B].
    x_bits = jax.random.bernoulli(key, p=0.5, shape=(N, C * B)).astype(jnp.float32)

    out = dequantization_layer(x_bits, B)
    out = jax.block_until_ready(out)

    ref = _reference(x_bits, B)
    assert out.shape == (N, C), out.shape
    assert out.dtype == jnp.float32, out.dtype
    # Exact match: bits are 0/1, weights are powers of two, f32 accumulation
    # (exact-integer guarantee holds for B <= 24, matching PyTorch f32).
    assert jnp.allclose(out, ref, atol=0.0, rtol=0.0), "mismatch vs reference"

    print("KERNEL_OK")
</pallas_src>

<mosaic_0001>
module attributes {stable_mosaic.version = 11 : i64} {
  func.func @_dequant_kernel(%arg0: i32, %arg1: memref<4x8x128xbf16, #tpu.memory_space<vmem>>, %arg2: memref<8x128xf32, #tpu.memory_space<vmem>>) attributes {dimension_semantics = [#tpu.dimension_semantics<parallel>], iteration_bounds = array<i64: 1>, scalar_prefetch = 0 : i64, scratch_operands = 0 : i64, tpu.core_type = #tpu.core_type<tc>, window_params = [{transform_indices = @transform_0, window_bounds = array<i64: 4, 8, 128>}, {transform_indices = @transform_1, window_bounds = array<i64: 8, 128>}]} {
    %c0 = arith.constant 0 : index
    %c0_0 = arith.constant 0 : index
    %c0_1 = arith.constant 0 : index
    %0 = vector.load %arg1[%c0, %c0_0, %c0_1] : memref<4x8x128xbf16, #tpu.memory_space<vmem>>, vector<1x8x128xbf16>
    %1 = vector.shape_cast %0 : vector<1x8x128xbf16> to vector<8x128xbf16>
    %2 = arith.extf %1 : vector<8x128xbf16> to vector<8x128xf32>
    %cst = arith.constant 8.000000e+00 : f32
    %3 = vector.broadcast %cst : f32 to vector<8x128xf32>
    %4 = arith.mulf %2, %3 : vector<8x128xf32>
    %c1 = arith.constant 1 : index
    %c0_2 = arith.constant 0 : index
    %c0_3 = arith.constant 0 : index
    %5 = vector.load %arg1[%c1, %c0_2, %c0_3] : memref<4x8x128xbf16, #tpu.memory_space<vmem>>, vector<1x8x128xbf16>
    %6 = vector.shape_cast %5 : vector<1x8x128xbf16> to vector<8x128xbf16>
    %7 = arith.extf %6 : vector<8x128xbf16> to vector<8x128xf32>
    %cst_4 = arith.constant 4.000000e+00 : f32
    %8 = vector.broadcast %cst_4 : f32 to vector<8x128xf32>
    %9 = arith.mulf %7, %8 : vector<8x128xf32>
    %10 = arith.addf %4, %9 : vector<8x128xf32>
    %c2 = arith.constant 2 : index
    %c0_5 = arith.constant 0 : index
    %c0_6 = arith.constant 0 : index
    %11 = vector.load %arg1[%c2, %c0_5, %c0_6] : memref<4x8x128xbf16, #tpu.memory_space<vmem>>, vector<1x8x128xbf16>
    %12 = vector.shape_cast %11 : vector<1x8x128xbf16> to vector<8x128xbf16>
    %13 = arith.extf %12 : vector<8x128xbf16> to vector<8x128xf32>
    %cst_7 = arith.constant 2.000000e+00 : f32
    %14 = vector.broadcast %cst_7 : f32 to vector<8x128xf32>
    %15 = arith.mulf %13, %14 : vector<8x128xf32>
    %16 = arith.addf %10, %15 : vector<8x128xf32>
    %c3 = arith.constant 3 : index
    %c0_8 = arith.constant 0 : index
    %c0_9 = arith.constant 0 : index
    %17 = vector.load %arg1[%c3, %c0_8, %c0_9] : memref<4x8x128xbf16, #tpu.memory_space<vmem>>, vector<1x8x128xbf16>
    %18 = vector.shape_cast %17 : vector<1x8x128xbf16> to vector<8x128xbf16>
    %19 = arith.extf %18 : vector<8x128xbf16> to vector<8x128xf32>
    %cst_10 = arith.constant 1.000000e+00 : f32
    %20 = vector.broadcast %cst_10 : f32 to vector<8x128xf32>
    %21 = arith.mulf %19, %20 : vector<8x128xf32>
    %22 = arith.addf %16, %21 : vector<8x128xf32>
    %c0_11 = arith.constant 0 : index
    %c0_12 = arith.constant 0 : index
    %23 = vector.load %arg2[%c0_11, %c0_12] : memref<8x128xf32, #tpu.memory_space<vmem>>, vector<8x128xf32>
    tpu.vector_store %arg2[%c0_11, %c0_12], %22 {strides = array<i32>} : memref<8x128xf32, #tpu.memory_space<vmem>>, vector<8x128xf32>,
    return
  }
  func.func @transform_0(%arg0: i32) -> (i32, i32, i32) {
    %c0_i32 = arith.constant 0 : i32
    %c0_i32_0 = arith.constant 0 : i32
    %c0_i32_1 = arith.constant 0 : i32
    return %c0_i32, %arg0, %c0_i32_0 : i32, i32, i32
  }
  func.func @transform_1(%arg0: i32) -> (i32, i32) {
    %c0_i32 = arith.constant 0 : i32
    %c0_i32_0 = arith.constant 0 : i32
    return %arg0, %c0_i32 : i32, i32
  }
}

</mosaic_0001>

<llo_original>
// kernel: tpu_custom_call.1
$region0: #{tpu_custom_call.1}
  #allocation0 [shape = 'u32[]', space=smem, size = 0x4, offset = 0x4, fixed_abs, tag = 'smem constant byte address 0x4 - core index']
  #allocation1 [shape = 'u32[72,128]{1,0:T(1,128)}', space=vmem, size = 0x9000, scoped, tag = 'internal scratch']
  %s0 = inlined_call_operand.hbm [shape: bf16[4,8,128], index: 0, kind: input, shape index: {}]
  %s1 = inlined_call_operand.hbm [shape: f32[8,128], index: 1, kind: output, shape index: {}]
  %s2 = sld [smem:[#allocation0]]
  $region18: #{tpu_custom_call.1} parent=0
    _
  %s4 = ssub.s32 1, %s2
  %s5 = scalar_select 0, %s4, %s2
  $region1: #{tpu_custom_call.1} parent=0
    #allocation2 [shape = 'u8[8192]{0}', space=vmem, size = 0x2000, scoped, tag = 'input window, operand 0, single buffered']
    #allocation3 [shape = 's32[1]{0}', space=sflag, size = 0x4, scoped, tag = 'scoped memory for tpu_custom_call.1']
    #allocation4 [shape = 's32[1]{0}', space=sflag, size = 0x4, scoped, tag = 'scoped memory for tpu_custom_call.1']
    #allocation5 [shape = 'u8[4096]{0}', space=vmem, size = 0x1000, scoped, tag = 'output window, operand 0, single buffered']
    %6 = vsyncpa [#allocation3], 0
    %7 = vsyncpa [#allocation4], 0
    // Predicated region
    $region2: #{tpu_custom_call.1} parent=1 // pred_check
      _
    $region3: #{tpu_custom_call.1} parent=1 // pred_check_branch
      %9 = sbr.rel (0) target = $region5
    $region4: #{tpu_custom_call.1} parent=1 // pred_region
      %11 = vsyncadd [#allocation3], 0
      %s12 = sshll.u32 %s0, 4
      %s13 = int_to_ptr.hbm [resolvable:$true] %s12
      %s14 = sshll.u32 [#allocation2], 4
      %s15 = int_to_ptr.vmem [resolvable:$true] %s14
      %20 = dma.hbm_to_vmem [thread:$0]  %s13, 256, %s15, [#allocation3], 64, 64, 4
    $region5: #{tpu_custom_call.1} parent=1 // pred_fallthru
      _
    // Predicated region
    $region6: #{tpu_custom_call.1} parent=1 // pred_check
      _
    $region7: #{tpu_custom_call.1} parent=1 // pred_check_branch
      %22 = sbr.rel (0) target = $region9
    $region8: #{tpu_custom_call.1} parent=1 // pred_region
      %24 = dma.done [#allocation3], 256
    $region9: #{tpu_custom_call.1} parent=1 // pred_fallthru
      _
    %v25 = vld [vmem:[#allocation2] sm:$0xf]
    %v26 = vunpack.c.l.bf16 %v25
    %v27 = vmul.f32 %v26, 8.0
    %s28 = scalar_lea.vmem [#allocation2], 4
    %v29 = vld [vmem:[%s28] sm:$0xf]
    %v30 = vunpack.c.l.bf16 %v29
    %v31 = vmul.f32 %v30, 4.0
    %v32 = vadd.f32 %v27, %v31
    %s33 = scalar_lea.vmem [#allocation2], 8
    %v34 = vld [vmem:[%s33] sm:$0xf]
    %v35 = vunpack.c.l.bf16 %v34
    %v36 = vmul.f32 %v35, 2.0
    %v37 = vadd.f32 %v32, %v36
    %s38 = scalar_lea.vmem [#allocation2], 12
    %v39 = vld [vmem:[%s38] sm:$0xf]
    %v40 = vunpack.c.l.bf16 %v39
    %v41 = vadd.f32 %v37, %v40
    %42 = vst [vmem:[#allocation5] sm:$0xff] %v41
    // Predicated region
    $region10: #{tpu_custom_call.1} parent=1 // pred_check
      _
    $region11: #{tpu_custom_call.1} parent=1 // pred_check_branch
      %44 = sbr.rel (0) target = $region13
    $region12: #{tpu_custom_call.1} parent=1 // pred_region
      %46 = vsyncadd [#allocation4], 0
      %s48 = sshll.u32 [#allocation5], 4
      %s49 = int_to_ptr.vmem [resolvable:$true] %s48
      %s50 = sshll.u32 %s1, 4
      %s51 = int_to_ptr.hbm [resolvable:$true] %s50
      %53 = dma.vmem_to_hbm [thread:$0]  %s49, 128, %s51, [#allocation4]
    $region13: #{tpu_custom_call.1} parent=1 // pred_fallthru
      _
    // Predicated region
    $region14: #{tpu_custom_call.1} parent=1 // pred_check
      _
    $region15: #{tpu_custom_call.1} parent=1 // pred_check_branch
      %55 = sbr.rel (0) target = $region17
    $region16: #{tpu_custom_call.1} parent=1 // pred_region
      %57 = dma.done [#allocation4], 128
    $region17: #{tpu_custom_call.1} parent=1 // pred_fallthru
      _
    %58 = vsyncpa [#allocation3], 1
    %59 = vsyncpa [#allocation4], 1

</llo_original>
